<compile_context>
chip_gen: v5e
topology: v5e:2x2
jax: 0.10.0
libtpu: 0.0.40
codegen_flags: <defaults>
</compile_context>

<pallas_src>
import jax
import jax.numpy as jnp
from jax.experimental import pallas as pl
from jax.experimental.pallas import tpu as pltpu


def _bilinear_matrix(out_size, in_size):
    """(out_size, in_size) interpolation matrix, align_corners=True semantics."""
    if in_size == 1:
        return jnp.ones((out_size, 1), jnp.float32)
    i = jnp.arange(out_size, dtype=jnp.float32)
    s = i * (in_size - 1) / (out_size - 1)
    lo = jnp.clip(jnp.floor(s), 0, in_size - 2).astype(jnp.int32)
    frac = s - lo.astype(jnp.float32)
    rows = jnp.arange(out_size)
    m = jnp.zeros((out_size, in_size), jnp.float32)
    m = m.at[rows, lo].add(1.0 - frac)
    m = m.at[rows, lo + 1].add(frac)
    return m


def _upsample_conv_kernel(ah_ref, x_ref, m_ref, b_ref, o_ref):
    """One batch element: H-upsample matmul, then fused (W-upsample x 1x1 conv).

    ah_ref : (H_out, H)              H-axis bilinear interpolation matrix
    x_ref  : (1, H, W*Cin)           channels-last-flattened input slab
    m_ref  : (W*Cin, W_out*Cout)     fused W-interp (x) conv-weight matrix
    b_ref  : (1, W_out*Cout)         conv bias tiled across W_out (lane-dense)
    o_ref  : (1, H_out, W_out*Cout)  lane-dense output slab
    """
    # Upsample along H: (H_out, H) @ (H, W*Cin) -> (H_out, W*Cin)
    t = jnp.dot(ah_ref[...], x_ref[0], preferred_element_type=jnp.float32)
    # Fused W-upsample + 1x1 conv + bias: (H_out, W*Cin) @ (W*Cin, W_out*Cout)
    y = jnp.dot(t, m_ref[...], preferred_element_type=jnp.float32) + b_ref[...]
    o_ref[0] = y.astype(o_ref.dtype)


def upsample_conv_forward(x_nchw, w_oihw, bias, *, scale=2):
    """x_nchw: (N, Cin, H, W) f32; w_oihw: (Cout, Cin, 1, 1); bias: (Cout,).

    Returns (N, Cout, scale*H, scale*W) f32 =
        Conv1x1( bilinear_upsample_align_corners(x, scale) ).
    """
    N, Cin, H, W = x_nchw.shape
    Cout = w_oihw.shape[0]
    H_out, W_out = H * scale, W * scale

    # ---- static operator packing (tiny, plain JAX) ----
    ah = _bilinear_matrix(H_out, H)                      # (H_out, H)
    aw = _bilinear_matrix(W_out, W)                      # (W_out, W)
    wc = w_oihw.reshape(Cout, Cin).astype(jnp.float32)   # 1x1 conv weight
    # M[q*Cin + c, j*Cout + o] = aw[j, q] * wc[o, c]
    m = jnp.einsum('jq,oc->qcjo', aw, wc).reshape(W * Cin, W_out * Cout)
    brow = jnp.tile(bias.astype(jnp.float32), W_out).reshape(1, W_out * Cout)

    # ---- layout glue: NCHW -> (N, H, W*Cin) ----
    x2d = jnp.transpose(x_nchw, (0, 2, 3, 1)).reshape(N, H, W * Cin)

    out2d = pl.pallas_call(
        _upsample_conv_kernel,
        out_shape=jax.ShapeDtypeStruct((N, H_out, W_out * Cout), jnp.float32),
        grid=(N,),
        in_specs=[
            pl.BlockSpec((H_out, H), lambda n: (0, 0)),
            pl.BlockSpec((1, H, W * Cin), lambda n: (n, 0, 0)),
            pl.BlockSpec((W * Cin, W_out * Cout), lambda n: (0, 0)),
            pl.BlockSpec((1, W_out * Cout), lambda n: (0, 0)),
        ],
        out_specs=pl.BlockSpec((1, H_out, W_out * Cout), lambda n: (n, 0, 0)),
        compiler_params=pltpu.CompilerParams(
            dimension_semantics=("parallel",)),
    )(ah, x2d, m, brow)

    out = out2d.reshape(N, H_out, W_out, Cout)
    return jnp.transpose(out, (0, 3, 1, 2))              # back to NCHW


def _reference(x, w, b, scale=2):
    """Independent pure-JAX reference: bilinear(align_corners) up, then 1x1 conv."""
    N, C, H, W = x.shape
    Ho, Wo = H * scale, W * scale
    ys = jnp.arange(Ho, dtype=jnp.float32) * (H - 1) / (Ho - 1)
    xs = jnp.arange(Wo, dtype=jnp.float32) * (W - 1) / (Wo - 1)
    y0 = jnp.clip(jnp.floor(ys), 0, H - 2).astype(jnp.int32)
    x0 = jnp.clip(jnp.floor(xs), 0, W - 2).astype(jnp.int32)
    fy = (ys - y0.astype(jnp.float32))[None, None, :, None]
    fx = (xs - x0.astype(jnp.float32))[None, None, None, :]

    def g(yy, xx):
        return x[:, :, yy[:, None], xx[None, :]]          # (N, C, Ho, Wo)

    up = ((1 - fy) * (1 - fx) * g(y0, x0)
          + (1 - fy) * fx * g(y0, x0 + 1)
          + fy * (1 - fx) * g(y0 + 1, x0)
          + fy * fx * g(y0 + 1, x0 + 1))
    y = jax.lax.conv_general_dilated(
        up, w, window_strides=(1, 1), padding='VALID',
        dimension_numbers=("NCHW", "OIHW", "NCHW"))
    return y + b.reshape(1, -1, 1, 1)


if __name__ == "__main__":
    # Small shapes consistent with the module: N=2, Cin=4, Cout=8, 16x16 spatial.
    N, Cin, Cout, H, W = 2, 4, 8, 16, 16

    key = jax.random.PRNGKey(0)
    kx, kw, kb = jax.random.split(key, 3)
    x = jax.random.normal(kx, (N, Cin, H, W), dtype=jnp.float32)
    w = jax.random.normal(kw, (Cout, Cin, 1, 1), dtype=jnp.float32) * 0.1
    b = jax.random.normal(kb, (Cout,), dtype=jnp.float32) * 0.1

    out = upsample_conv_forward(x, w, b)
    out = jax.block_until_ready(out)

    ref = _reference(x, w, b)
    assert out.shape == (N, Cout, 2 * H, 2 * W), out.shape
    assert jnp.allclose(out, ref, atol=1e-4, rtol=1e-4), float(
        jnp.max(jnp.abs(out - ref)))

    print("KERNEL_OK")
</pallas_src>

<mosaic_0001>
module attributes {stable_mosaic.version = 11 : i64} {
  func.func @_upsample_conv_kernel(%arg0: i32, %arg1: memref<32x16xf32, #tpu.memory_space<vmem>>, %arg2: memref<1x16x64xf32, #tpu.memory_space<vmem>>, %arg3: memref<64x256xf32, #tpu.memory_space<vmem>>, %arg4: memref<1x256xf32, #tpu.memory_space<vmem>>, %arg5: memref<1x32x256xf32, #tpu.memory_space<vmem>>) attributes {dimension_semantics = [#tpu.dimension_semantics<parallel>], iteration_bounds = array<i64: 2>, scalar_prefetch = 0 : i64, scratch_operands = 0 : i64, tpu.core_type = #tpu.core_type<tc>, window_params = [{pipeline_mode = #tpu.pipeline_mode<synchronous>, transform_indices = @transform_0, window_bounds = array<i64: 32, 16>}, {transform_indices = @transform_1, window_bounds = array<i64: 1, 16, 64>}, {pipeline_mode = #tpu.pipeline_mode<synchronous>, transform_indices = @transform_2, window_bounds = array<i64: 64, 256>}, {pipeline_mode = #tpu.pipeline_mode<synchronous>, transform_indices = @transform_3, window_bounds = array<i64: 1, 256>}, {transform_indices = @transform_4, window_bounds = array<i64: 1, 32, 256>}]} {
    %c0 = arith.constant 0 : index
    %c0_0 = arith.constant 0 : index
    %0 = vector.load %arg1[%c0, %c0_0] : memref<32x16xf32, #tpu.memory_space<vmem>>, vector<32x16xf32>
    %c0_1 = arith.constant 0 : index
    %c0_2 = arith.constant 0 : index
    %c0_3 = arith.constant 0 : index
    %1 = vector.load %arg2[%c0_1, %c0_2, %c0_3] : memref<1x16x64xf32, #tpu.memory_space<vmem>>, vector<1x16x64xf32>
    %2 = vector.shape_cast %1 : vector<1x16x64xf32> to vector<16x64xf32>
    %cst = arith.constant dense<0.000000e+00> : vector<32x64xf32>
    %3 = tpu.matmul %0, %2, %cst {dimension_numbers = #tpu.dot_dimension_numbers<[1], [0], [0], [1], [0, 0, 1, 1], [], []>} : vector<32x16xf32>, vector<16x64xf32>, vector<32x64xf32> -> vector<32x64xf32>
    %c0_4 = arith.constant 0 : index
    %c0_5 = arith.constant 0 : index
    %4 = vector.load %arg3[%c0_4, %c0_5] : memref<64x256xf32, #tpu.memory_space<vmem>>, vector<64x256xf32>
    %cst_6 = arith.constant dense<0.000000e+00> : vector<32x256xf32>
    %5 = tpu.matmul %3, %4, %cst_6 {dimension_numbers = #tpu.dot_dimension_numbers<[1], [0], [0], [1], [0, 0, 1, 1], [], []>} : vector<32x64xf32>, vector<64x256xf32>, vector<32x256xf32> -> vector<32x256xf32>
    %c0_7 = arith.constant 0 : index
    %c0_8 = arith.constant 0 : index
    %6 = vector.load %arg4[%c0_7, %c0_8] : memref<1x256xf32, #tpu.memory_space<vmem>>, vector<1x256xf32>
    %7 = vector.broadcast %6 : vector<1x256xf32> to vector<32x256xf32>
    %8 = arith.addf %5, %7 : vector<32x256xf32>
    %c0_9 = arith.constant 0 : index
    %c0_10 = arith.constant 0 : index
    %c0_11 = arith.constant 0 : index
    %9 = vector.load %arg5[%c0_9, %c0_10, %c0_11] : memref<1x32x256xf32, #tpu.memory_space<vmem>>, vector<1x32x256xf32>
    %10 = vector.shape_cast %9 : vector<1x32x256xf32> to vector<32x256xf32>
    %11 = vector.shape_cast %8 : vector<32x256xf32> to vector<1x32x256xf32>
    tpu.vector_store %arg5[%c0_9, %c0_10, %c0_11], %11 {strides = array<i32>} : memref<1x32x256xf32, #tpu.memory_space<vmem>>, vector<1x32x256xf32>,
    return
  }
  func.func @transform_0(%arg0: i32) -> (i32, i32) {
    %c0_i32 = arith.constant 0 : i32
    %c0_i32_0 = arith.constant 0 : i32
    %c0_i32_1 = arith.constant 0 : i32
    return %c0_i32, %c0_i32_0 : i32, i32
  }
  func.func @transform_1(%arg0: i32) -> (i32, i32, i32) {
    %c0_i32 = arith.constant 0 : i32
    %c0_i32_0 = arith.constant 0 : i32
    %c0_i32_1 = arith.constant 0 : i32
    return %arg0, %c0_i32, %c0_i32_0 : i32, i32, i32
  }
  func.func @transform_2(%arg0: i32) -> (i32, i32) {
    %c0_i32 = arith.constant 0 : i32
    %c0_i32_0 = arith.constant 0 : i32
    %c0_i32_1 = arith.constant 0 : i32
    return %c0_i32, %c0_i32_0 : i32, i32
  }
  func.func @transform_3(%arg0: i32) -> (i32, i32) {
    %c0_i32 = arith.constant 0 : i32
    %c0_i32_0 = arith.constant 0 : i32
    %c0_i32_1 = arith.constant 0 : i32
    return %c0_i32, %c0_i32_0 : i32, i32
  }
  func.func @transform_4(%arg0: i32) -> (i32, i32, i32) {
    %c0_i32 = arith.constant 0 : i32
    %c0_i32_0 = arith.constant 0 : i32
    %c0_i32_1 = arith.constant 0 : i32
    return %arg0, %c0_i32, %c0_i32_0 : i32, i32, i32
  }
}

</mosaic_0001>

<llo_original>
// kernel: tpu_custom_call.1
$region0: #{tpu_custom_call.1}
  #allocation0 [shape = 'u32[]', space=smem, size = 0x4, offset = 0x4, fixed_abs, tag = 'smem constant byte address 0x4 - core index']
  #allocation1 [shape = 'u32[72,128]{1,0:T(1,128)}', space=vmem, size = 0x9000, scoped, tag = 'internal scratch']
  %s0 = inlined_call_operand.vmem [shape: f32[32,16], index: 0, kind: input, shape index: {}]
  %s1 = inlined_call_operand.vmem [shape: f32[2,16,64], index: 1, kind: input, shape index: {}]
  %s2 = inlined_call_operand.hbm [shape: f32[64,256], index: 2, kind: input, shape index: {}]
  %s3 = inlined_call_operand.vmem [shape: f32[1,256], index: 3, kind: input, shape index: {}]
  %s4 = inlined_call_operand.hbm [shape: f32[2,32,256], index: 4, kind: output, shape index: {}]
  %s5 = sld [smem:[#allocation0]]
  $region53: #{tpu_custom_call.1} parent=0
    _
  %s7 = ssub.s32 1, %s5
  %s8 = scalar_select 0, %s7, %s5
  $region1: #{tpu_custom_call.1} parent=0
    #allocation2 [shape = 'u8[65536]{0}', space=vmem, size = 0x10000, scoped, tag = 'input window, operand 2, single buffered']
    #allocation3 [shape = 's32[2]{0}', space=sflag, size = 0x8, scoped, tag = 'scoped memory for tpu_custom_call.1']
    #allocation4 [shape = 's32[2]{0}', space=sflag, size = 0x8, scoped, tag = 'scoped memory for tpu_custom_call.1']
    #allocation5 [shape = 'u8[65536]{0}', space=vmem, size = 0x10000, scoped, tag = 'output window, operand 0']
    %9 = vsyncpa [#allocation3], 0
    %10 = vsyncpa [#allocation4], 0
    %s11 = scalar_lea.sflag [#allocation4], 1
    %12 = vsyncpa %s11, 0
    loop: start=0, step=1, limit=4
    $region2: #{tpu_custom_call.1} parent=1 // loop_pre_header
      _
    $region3: #{tpu_custom_call.1} parent=1 // loop_header
      %s14 = sphi 0, %s18
      %p15 = scmp.ge.s32.totalorder %s14, 4
      %s22 = sphi 0, %s22
      %s24 = sphi 0, %s22
      %s25 = sphi 0, %s24
      %s39 = sphi 0, %s25
      %s45 = sphi 0, %s47
      %s48 = sphi 0, %s45
      %s49 = sphi 0, %s48
      %s65 = sphi 0, %s49
      %s69 = sphi 0, %s69
      %s71 = sphi 0, %s69
      %s72 = sphi 0, %s71
      %s86 = sphi 0, %s72
      %s90 = sphi 0, %s90
      %s92 = sphi 0, %s90
      %s93 = sphi 0, %s92
      %s107 = sphi 0, %s93
      %s113 = sphi 0, %s115
      %s116 = sphi 0, %s113
      %s117 = sphi 0, %s116
      %s133 = sphi 0, %s117
    $region4: #{tpu_custom_call.1} parent=1 // loop_header_branch
      %17 = sbr.rel (%p15) target = $region8
    $region5: #{tpu_custom_call.1} parent=1 // loop_body
      %s19 = ssub.s32 %s14, 1
      %s20 = ssub.s32 %s14, 2
      %s21 = sadd.s32 %s14, 1
      %s23 = sadd.s32 %s22, 1
      %p26 = scmp.eq.s32.totalorder %s14, 1
      %p27 = scmp.ne.s32.totalorder %s22, %s24
      %p28 = scmp.eq.s32.totalorder %s14, 0
      %p29 = por %p27, %p28
      %p30 = scmp.ne.s32.totalorder %s22, %s24
      %p31 = scmp.eq.s32.totalorder %s19, 1
      %p32 = por %p30, %p31
      %p33 = scmp.ne.s32.totalorder %s24, %s25
      %p34 = scmp.eq.s32.totalorder %s19, 0
      %p35 = por %p33, %p34
      %p36 = scmp.ne.s32.totalorder %s24, %s25
      %p37 = scmp.eq.s32.totalorder %s20, 1
      %p38 = por %p36, %p37
      %p40 = scmp.ne.s32.totalorder %s25, %s39
      %p41 = scmp.eq.s32.totalorder %s20, 0
      %p42 = por %p40, %p41
      %s43 = ssub.s32 %s14, %s21
      %p44 = scmp.eq.s32.totalorder %s43, 0
      %s46 = sadd.s32 %s45, 1
      %s47 = scalar_select %p44, %s45, %s46
      %p50 = pneg %p44
      %p51 = scmp.eq.s32.totalorder %s14, 1
      %p52 = por %p50, %p51
      %p53 = scmp.ne.s32.totalorder %s45, %s48
      %p54 = scmp.eq.s32.totalorder %s14, 0
      %p55 = por %p53, %p54
      %p56 = scmp.ne.s32.totalorder %s45, %s48
      %p57 = scmp.eq.s32.totalorder %s19, 1
      %p58 = por %p56, %p57
      %p59 = scmp.ne.s32.totalorder %s48, %s49
      %p60 = scmp.eq.s32.totalorder %s19, 0
      %p61 = por %p59, %p60
      %p62 = scmp.ne.s32.totalorder %s48, %s49
      %p63 = scmp.eq.s32.totalorder %s20, 1
      %p64 = por %p62, %p63
      %p66 = scmp.ne.s32.totalorder %s49, %s65
      %p67 = scmp.eq.s32.totalorder %s20, 0
      %p68 = por %p66, %p67
      %s70 = sadd.s32 %s69, 1
      %p73 = scmp.eq.s32.totalorder %s14, 1
      %p74 = scmp.ne.s32.totalorder %s69, %s71
      %p75 = scmp.eq.s32.totalorder %s14, 0
      %p76 = por %p74, %p75
      %p77 = scmp.ne.s32.totalorder %s69, %s71
      %p78 = scmp.eq.s32.totalorder %s19, 1
      %p79 = por %p77, %p78
      %p80 = scmp.ne.s32.totalorder %s71, %s72
      %p81 = scmp.eq.s32.totalorder %s19, 0
      %p82 = por %p80, %p81
      %p83 = scmp.ne.s32.totalorder %s71, %s72
      %p84 = scmp.eq.s32.totalorder %s20, 1
      %p85 = por %p83, %p84
      %p87 = scmp.ne.s32.totalorder %s72, %s86
      %p88 = scmp.eq.s32.totalorder %s20, 0
      %p89 = por %p87, %p88
      %s91 = sadd.s32 %s90, 1
      %p94 = scmp.eq.s32.totalorder %s14, 1
      %p95 = scmp.ne.s32.totalorder %s90, %s92
      %p96 = scmp.eq.s32.totalorder %s14, 0
      %p97 = por %p95, %p96
      %p98 = scmp.ne.s32.totalorder %s90, %s92
      %p99 = scmp.eq.s32.totalorder %s19, 1
      %p100 = por %p98, %p99
      %p101 = scmp.ne.s32.totalorder %s92, %s93
      %p102 = scmp.eq.s32.totalorder %s19, 0
      %p103 = por %p101, %p102
      %p104 = scmp.ne.s32.totalorder %s92, %s93
      %p105 = scmp.eq.s32.totalorder %s20, 1
      %p106 = por %p104, %p105
      %p108 = scmp.ne.s32.totalorder %s93, %s107
      %p109 = scmp.eq.s32.totalorder %s20, 0
      %p110 = por %p108, %p109
      %s111 = ssub.s32 %s14, %s21
      %p112 = scmp.eq.s32.totalorder %s111, 0
      %s114 = sadd.s32 %s113, 1
      %s115 = scalar_select %p112, %s113, %s114
      %p118 = pneg %p112
      %p119 = scmp.eq.s32.totalorder %s14, 1
      %p120 = por %p118, %p119
      %p121 = scmp.ne.s32.totalorder %s113, %s116
      %p122 = scmp.eq.s32.totalorder %s14, 0
      %p123 = por %p121, %p122
      %p124 = scmp.ne.s32.totalorder %s113, %s116
      %p125 = scmp.eq.s32.totalorder %s19, 1
      %p126 = por %p124, %p125
      %p127 = scmp.ne.s32.totalorder %s116, %s117
      %p128 = scmp.eq.s32.totalorder %s19, 0
      %p129 = por %p127, %p128
      %p130 = scmp.ne.s32.totalorder %s116, %s117
      %p131 = scmp.eq.s32.totalorder %s20, 1
      %p132 = por %p130, %p131
      %p134 = scmp.ne.s32.totalorder %s117, %s133
      %p135 = scmp.eq.s32.totalorder %s20, 0
      %p136 = por %p134, %p135
      %p137 = scmp.le.s32.totalorder 1, %s14
      %p138 = scmp.lt.s32.totalorder %s14, 3
      %p139 = pnand %p137, %p138
      %p140 = pneg %p139
      // Predicated region
      $region9: #{tpu_custom_call.1} parent=5 // pred_check
        _
      $region10: #{tpu_custom_call.1} parent=5 // pred_check_branch
        %142 = sbr.rel (%p139) target = $region12
      $region11: #{tpu_custom_call.1} parent=5 // pred_region
        %s143 = ssub.s32 %s14, 1
        // Predicated region
        $region13: #{tpu_custom_call.1} parent=11 // pred_check
          %p144 = pneg %p35
        $region14: #{tpu_custom_call.1} parent=11 // pred_check_branch
          %146 = sbr.rel (%p144) target = $region16
        $region15: #{tpu_custom_call.1} parent=11 // pred_region
          _
        $region16: #{tpu_custom_call.1} parent=11 // pred_fallthru
          _
        // Predicated region
        $region17: #{tpu_custom_call.1} parent=11 // pred_check
          %p147 = pneg %p82
        $region18: #{tpu_custom_call.1} parent=11 // pred_check_branch
          %149 = sbr.rel (%p147) target = $region20
        $region19: #{tpu_custom_call.1} parent=11 // pred_region
          %151 = vsyncadd [#allocation3], 0
          %s152 = sshll.u32 %s2, 4
          %s153 = int_to_ptr.hbm [resolvable:$true] %s152
          %s154 = sshll.u32 [#allocation2], 4
          %s155 = int_to_ptr.vmem [resolvable:$true] %s154
          %160 = dma.hbm_to_vmem [thread:$0]  %s153, 2048, %s155, [#allocation3], 256, 256, 16
        $region20: #{tpu_custom_call.1} parent=11 // pred_fallthru
          _
        // Predicated region
        $region21: #{tpu_custom_call.1} parent=11 // pred_check
          %p161 = pneg %p103
        $region22: #{tpu_custom_call.1} parent=11 // pred_check_branch
          %163 = sbr.rel (%p161) target = $region24
        $region23: #{tpu_custom_call.1} parent=11 // pred_region
          _
        $region24: #{tpu_custom_call.1} parent=11 // pred_fallthru
          _
      $region12: #{tpu_custom_call.1} parent=5 // pred_fallthru
        _
      %p164 = scmp.lt.s32.totalorder %s14, 2
      // Predicated region
      $region25: #{tpu_custom_call.1} parent=5 // pred_check
        %p165 = pneg %p164
      $region26: #{tpu_custom_call.1} parent=5 // pred_check_branch
        %167 = sbr.rel (%p165) target = $region28
      $region27: #{tpu_custom_call.1} parent=5 // pred_region
        // Predicated region
        $region29: #{tpu_custom_call.1} parent=27 // pred_check
          %p168 = pneg %p55
        $region30: #{tpu_custom_call.1} parent=27 // pred_check_branch
          %170 = sbr.rel (%p168) target = $region32
        $region31: #{tpu_custom_call.1} parent=27 // pred_region
          %p171 = scmp.lt.s32.totalorder %s14, 1
          %s172 = scalar_select %p171, %s14, 1
          %s173 = smul.addr %s172, 2
          %s174 = smul.addr %s173, 8
          %s175 = scalar_lea.vmem %s1, %s174
        $region32: #{tpu_custom_call.1} parent=27 // pred_fallthru
          _
      $region28: #{tpu_custom_call.1} parent=5 // pred_fallthru
        _
      %p176 = scmp.le.s32.totalorder 1, %s14
      %p177 = scmp.lt.s32.totalorder %s14, 3
      %p178 = pnand %p176, %p177
      %p179 = pneg %p178
      // Predicated region
      $region33: #{tpu_custom_call.1} parent=5 // pred_check
        _
      $region34: #{tpu_custom_call.1} parent=5 // pred_check_branch
        %181 = sbr.rel (%p178) target = $region36
      $region35: #{tpu_custom_call.1} parent=5 // pred_region
        %s182 = ssub.s32 %s14, 1
        // Predicated region
        $region37: #{tpu_custom_call.1} parent=35 // pred_check
          %p183 = pneg %p82
        $region38: #{tpu_custom_call.1} parent=35 // pred_check_branch
          %185 = sbr.rel (%p183) target = $region40
        $region39: #{tpu_custom_call.1} parent=35 // pred_region
          %187 = dma.done [#allocation3], 2048
        $region40: #{tpu_custom_call.1} parent=35 // pred_fallthru
          _
        %p188 = pneg %p35
        %p189 = pneg %p32
        %p190 = scmp.lt.s32.totalorder %s19, 1
        %s191 = scalar_select %p190, %s19, 1
        %s192 = smul.addr %s191, 2
        %s193 = smul.addr %s192, 8
        %s194 = scalar_lea.vmem %s1, %s193
        %p195 = pneg %p61
        %p196 = pneg %p58
        %p197 = pneg %p82
        %p198 = pneg %p79
        %p199 = pneg %p103
        %p200 = pneg %p100
        %p201 = pneg %p129
        %p202 = pneg %p126
        %s203 = sand.u32 %s116, 1
        %s204 = scalar_lea.sflag [#allocation4], %s203
        %s205 = sand.u32 %s116, 1
        %s206 = smul.addr %s205, 64
        %s207 = scalar_lea.vmem [#allocation5], %s206
        %p208 = scmp.lt.s32.totalorder %s19, 1
        %s209 = scalar_select %p208, %s19, 1
        %s210 = smul.addr %s209, 2
        %s211 = smul.addr %s210, 8
        %s212 = scalar_lea.vmem %s1, %s211
        %v213 = vld [vmem:[%s0] sm:$0xff]
        %v214 = vld [vmem:[%s0 + $0x8] sm:$0xff]
        %v215 = vld [vmem:[%s0 + $0x10] sm:$0xff]
        %v216 = vld [vmem:[%s0 + $0x18] sm:$0xff]
        %v217 = vld [vmem:[%s212] sm:$0xff]
        %v218 = vld [vmem:[%s212 + $0x8] sm:$0xff]
        %vm219 = vcmask 130048
        %v221 = vsel %vm219, %v213, 0
        %v224 = vsel %vm219, %v214, 0
        %v227 = vsel %vm219, %v215, 0
        %v230 = vsel %vm219, %v216, 0
        %232 = vmatpush.msra.mxu0 0.0
        %233 = vmatpush.msra.mxu0 0.0
        %234 = vmatpush.msra.mxu0 0.0
        %235 = vmatpush.msra.mxu0 0.0
        %236 = vmatpush.msra.mxu0 0.0
        %237 = vmatpush.msra.mxu0 0.0
        %238 = vmatpush.msra.mxu0 0.0
        %239 = vmatpush.msra.mxu0 0.0
        %240 = vmatpush.msra.mxu0 0.0
        %241 = vmatpush.msra.mxu0 0.0
        %242 = vmatpush.msra.mxu0 0.0
        %243 = vmatpush.msra.mxu0 0.0
        %244 = vmatpush.msra.mxu0 0.0
        %245 = vmatpush.msra.mxu0 0.0
        %246 = vmatpush.msra.mxu0 %v218
        %247 = vmatpush.msra.mxu0 %v217
        %248 = vmatmul.f32.gmra.mxu0 %v221
        %v249 = vpop.f32.mrf.mxu0
        %v250 = vadd.f32 0.0, %v249
        %251 = vmatmul.f32.gmra.mxu0 %v224
        %v252 = vpop.f32.mrf.mxu0
        %v253 = vadd.f32 0.0, %v252
        %254 = vmatmul.f32.gmra.mxu0 %v227
        %v255 = vpop.f32.mrf.mxu0
        %v256 = vadd.f32 0.0, %v255
        %257 = vmatmul.f32.gmra.mxu0 %v230
        %v258 = vpop.f32.mrf.mxu0
        %v259 = vadd.f32 0.0, %v258
        %260 = vdwg.mxu0
        %v261 = vld [vmem:[#allocation2] sm:$0xff]
        %v262 = vld [vmem:[#allocation2 + $0x8] sm:$0xff]
        %v263 = vld [vmem:[#allocation2 + $0x10] sm:$0xff]
        %v264 = vld [vmem:[#allocation2 + $0x18] sm:$0xff]
        %v265 = vld [vmem:[#allocation2 + $0x20] sm:$0xff]
        %v266 = vld [vmem:[#allocation2 + $0x28] sm:$0xff]
        %v267 = vld [vmem:[#allocation2 + $0x30] sm:$0xff]
        %v268 = vld [vmem:[#allocation2 + $0x38] sm:$0xff]
        %v269 = vld [vmem:[#allocation2 + $0x40] sm:$0xff]
        %v270 = vld [vmem:[#allocation2 + $0x48] sm:$0xff]
        %v271 = vld [vmem:[#allocation2 + $0x50] sm:$0xff]
        %v272 = vld [vmem:[#allocation2 + $0x58] sm:$0xff]
        %v273 = vld [vmem:[#allocation2 + $0x60] sm:$0xff]
        %v274 = vld [vmem:[#allocation2 + $0x68] sm:$0xff]
        %v275 = vld [vmem:[#allocation2 + $0x70] sm:$0xff]
        %v276 = vld [vmem:[#allocation2 + $0x78] sm:$0xff]
        %v277 = vld [vmem:[%s3] sm:$0x3]
        %v279 = vperm.slane %v277, 0
        %v280 = vperm.slane %v277, 1
        %vm283 = vcmask 523264
        %v285 = vsel %vm283, %v250, 0
        %v288 = vsel %vm283, %v253, 0
        %v291 = vsel %vm283, %v256, 0
        %v294 = vsel %vm283, %v259, 0
        %296 = vmatpush.msra.mxu0 0.0
        %297 = vmatpush.msra.mxu0 0.0
        %298 = vmatpush.msra.mxu0 0.0
        %299 = vmatpush.msra.mxu0 0.0
        %300 = vmatpush.msra.mxu0 0.0
        %301 = vmatpush.msra.mxu0 0.0
        %302 = vmatpush.msra.mxu0 0.0
        %303 = vmatpush.msra.mxu0 0.0
        %304 = vmatpush.msra.mxu0 %v275
        %305 = vmatpush.msra.mxu0 %v273
        %306 = vmatpush.msra.mxu0 %v271
        %307 = vmatpush.msra.mxu0 %v269
        %308 = vmatpush.msra.mxu0 %v267
        %309 = vmatpush.msra.mxu0 %v265
        %310 = vmatpush.msra.mxu0 %v263
        %311 = vmatpush.msra.mxu0 %v261
        %312 = vmatmul.f32.gmra.mxu0 %v285
        %v313 = vpop.f32.mrf.mxu0
        %v314 = vadd.f32 %v279, %v313
        %315 = vmatmul.f32.gmra.mxu0 %v288
        %v316 = vpop.f32.mrf.mxu0
        %v317 = vadd.f32 %v279, %v316
        %318 = vmatmul.f32.gmra.mxu0 %v291
        %v319 = vpop.f32.mrf.mxu0
        %v320 = vadd.f32 %v279, %v319
        %321 = vmatmul.f32.gmra.mxu0 %v294
        %v322 = vpop.f32.mrf.mxu0
        %v323 = vadd.f32 %v279, %v322
        %324 = vdwg.mxu0
        %325 = vmatpush.msra.mxu0 0.0
        %326 = vmatpush.msra.mxu0 0.0
        %327 = vmatpush.msra.mxu0 0.0
        %328 = vmatpush.msra.mxu0 0.0
        %329 = vmatpush.msra.mxu0 0.0
        %330 = vmatpush.msra.mxu0 0.0
        %331 = vmatpush.msra.mxu0 0.0
        %332 = vmatpush.msra.mxu0 0.0
        %333 = vmatpush.msra.mxu0 %v276
        %334 = vmatpush.msra.mxu0 %v274
        %335 = vmatpush.msra.mxu0 %v272
        %336 = vmatpush.msra.mxu0 %v270
        %337 = vmatpush.msra.mxu0 %v268
        %338 = vmatpush.msra.mxu0 %v266
        %339 = vmatpush.msra.mxu0 %v264
        %340 = vmatpush.msra.mxu0 %v262
        %341 = vmatmul.f32.gmra.mxu0 %v285
        %v342 = vpop.f32.mrf.mxu0
        %v343 = vadd.f32 %v280, %v342
        %344 = vmatmul.f32.gmra.mxu0 %v288
        %v345 = vpop.f32.mrf.mxu0
        %v346 = vadd.f32 %v280, %v345
        %347 = vmatmul.f32.gmra.mxu0 %v291
        %v348 = vpop.f32.mrf.mxu0
        %v349 = vadd.f32 %v280, %v348
        %350 = vmatmul.f32.gmra.mxu0 %v294
        %v351 = vpop.f32.mrf.mxu0
        %v352 = vadd.f32 %v280, %v351
        %353 = vdwg.mxu0
        %354 = vst [vmem:[%s207] sm:$0xff] %v314
        %355 = vst [vmem:[%s207 + $0x8] sm:$0xff] %v343
        %356 = vst [vmem:[%s207 + $0x10] sm:$0xff] %v317
        %357 = vst [vmem:[%s207 + $0x18] sm:$0xff] %v346
        %358 = vst [vmem:[%s207 + $0x20] sm:$0xff] %v320
        %359 = vst [vmem:[%s207 + $0x28] sm:$0xff] %v349
        %360 = vst [vmem:[%s207 + $0x30] sm:$0xff] %v323
        %361 = vst [vmem:[%s207 + $0x38] sm:$0xff] %v352
        %s362 = sand.u32 %s116, 1
        %s363 = scalar_lea.sflag [#allocation4], %s362
        %s364 = sand.u32 %s116, 1
        %s365 = smul.addr %s364, 64
        %s366 = scalar_lea.vmem [#allocation5], %s365
        // Predicated region
        $region41: #{tpu_custom_call.1} parent=35 // pred_check
          %p367 = pneg %p126
        $region42: #{tpu_custom_call.1} parent=35 // pred_check_branch
          %369 = sbr.rel (%p367) target = $region44
        $region43: #{tpu_custom_call.1} parent=35 // pred_region
          %371 = vsyncadd %s363, 0
          %s372 = smul.addr %s19, 8
          %s373 = smul.addr %s372, 8
          %s374 = scalar_lea.hbm %s4, %s373
          %s375 = sshll.u32 %s366, 4
          %s376 = int_to_ptr.vmem [resolvable:$true] %s375
          %s377 = sshll.u32 %s374, 4
          %s378 = int_to_ptr.hbm [resolvable:$true] %s377
          %383 = dma.vmem_to_hbm [thread:$0]  %s376, 1024, %s378, %s363, 256, 256, 16
        $region44: #{tpu_custom_call.1} parent=35 // pred_fallthru
          _
      $region36: #{tpu_custom_call.1} parent=5 // pred_fallthru
        _
      %p384 = scmp.le.s32.totalorder 2, %s14
      // Predicated region
      $region45: #{tpu_custom_call.1} parent=5 // pred_check
        %p385 = pneg %p384
      $region46: #{tpu_custom_call.1} parent=5 // pred_check_branch
        %387 = sbr.rel (%p385) target = $region48
      $region47: #{tpu_custom_call.1} parent=5 // pred_region
        %s388 = ssub.s32 %s14, 2
        // Predicated region
        $region49: #{tpu_custom_call.1} parent=47 // pred_check
          %p389 = pneg %p132
        $region50: #{tpu_custom_call.1} parent=47 // pred_check_branch
          %391 = sbr.rel (%p389) target = $region52
        $region51: #{tpu_custom_call.1} parent=47 // pred_region
          %s392 = sand.u32 %s117, 1
          %s393 = scalar_lea.sflag [#allocation4], %s392
          %s394 = sand.u32 %s117, 1
          %s395 = smul.addr %s394, 64
          %s396 = scalar_lea.vmem [#allocation5], %s395
          %398 = dma.done %s393, 1024
        $region52: #{tpu_custom_call.1} parent=47 // pred_fallthru
          _
      $region48: #{tpu_custom_call.1} parent=5 // pred_fallthru
        _
    $region6: #{tpu_custom_call.1} parent=1 // loop_footer
      %s18 = sadd.s32 1, %s14
    $region7: #{tpu_custom_call.1} parent=1 // loop_footer_branch
      %13 = sbr.rel target = $region3
    $region8: #{tpu_custom_call.1} parent=1 // loop_exit
      _
    %399 = vsyncpa [#allocation3], 1
    %s400 = scalar_lea.sflag [#allocation3], 1
    %401 = vsyncpa %s400, 1
    %402 = vsyncpa [#allocation4], 1
    %s403 = scalar_lea.sflag [#allocation4], 1
    %404 = vsyncpa %s403, 1

</llo_original>
